<compile_context>
chip_gen: v7x
topology: tpu7x:2x2x1
jax: 0.10.0
libtpu: 0.0.40
codegen_flags: <defaults>
</compile_context>

<pallas_src>
import math

import jax
import jax.numpy as jnp
from jax.experimental import pallas as pl
from jax.experimental.pallas import tpu as pltpu


def _mlp_kernel(x_ref, w1_ref, b1_ref, w2_ref, b2_ref, o_ref, acc_ref):
    # x_ref:  (tm, D_in)   VMEM (compute dtype)
    # w1_ref: (D_in, th)   VMEM (compute dtype)
    # b1_ref: (1, th)      VMEM (f32)
    # w2_ref: (th, tn)     VMEM (compute dtype)
    # b2_ref: (1, tn)      VMEM (f32)
    # o_ref:  (tm, tn)     VMEM (output dtype)
    # acc_ref:(tm, tn)     VMEM scratch (f32), persists across the hidden axis
    k = pl.program_id(2)

    @pl.when(k == 0)
    def _init():
        # Fold b2 into the accumulator init -> no separate (tm, tn) bias pass.
        acc_ref[...] = jnp.broadcast_to(b2_ref[...], acc_ref.shape)

    h = jnp.dot(x_ref[...], w1_ref[...], preferred_element_type=jnp.float32)
    h = jnp.maximum(h + b1_ref[...], 0.0)          # bias + ReLU on f32 partials
    acc_ref[...] += jnp.dot(h.astype(w2_ref.dtype), w2_ref[...],
                            preferred_element_type=jnp.float32)

    @pl.when(k == pl.num_programs(2) - 1)
    def _finalize():
        o_ref[...] = acc_ref[...].astype(o_ref.dtype)


def _round_up(x, mult):
    return ((x + mult - 1) // mult) * mult


def _pick_tile(dim, target, align):
    """Largest multiple of `align` that divides `dim` and is <= target.
    If dim <= target (or no aligned divisor exists) the full dim is used."""
    if dim <= target:
        return dim
    t = (target // align) * align
    while t >= align:
        if dim % t == 0:
            return t
        t -= align
    return dim


def mlp_pallas(x, w1, b1, w2, b2, *, tile_m=None, tile_n=None, tile_h=None,
               compute_dtype=None):
    """x: [..., D_in]; w1: [D_in, H]; b1: [H]; w2: [H, D_out]; b2: [D_out].

    compute_dtype: optional dtype (e.g. jnp.bfloat16) for the matmul operands;
    accumulation and biases stay in float32. Output dtype follows x.dtype.
    """
    d_in = x.shape[-1]
    hidden = w1.shape[1]
    d_out = w2.shape[1]
    lead_shape = x.shape[:-1]
    out_dtype = x.dtype

    cdt = compute_dtype or x.dtype
    itemsize = jnp.dtype(cdt).itemsize

    x2 = x.reshape(-1, d_in).astype(cdt)              # [tokens, D_in]
    w1c = w1.astype(cdt)
    w2c = w2.astype(cdt)
    b1_2d = b1.reshape(1, hidden).astype(jnp.float32)
    b2_2d = b2.reshape(1, d_out).astype(jnp.float32)

    m = x2.shape[0]

    # ---- tile selection -----------------------------------------------------
    # Rows: >=256 (f32) / 512 (bf16) keeps us near the HBM roofline while giving
    # the pipeliner several steps; padded up so no divisibility assert is needed.
    tm_default = 512 if itemsize <= 2 else 256
    tm = tile_m or min(tm_default, _round_up(m, 8))
    tm = max(8, _round_up(tm, 8))
    m_pad = _round_up(m, tm)
    if m_pad > m:
        x2 = jnp.pad(x2, ((0, m_pad - m), (0, 0)))

    # Hidden (reduction) tile: keeps W1/W2 tiles VMEM-resident per step and
    # kills the full (tm, H) intermediate.  Output tile: lane-dense (>=128).
    th = tile_h or _pick_tile(hidden, 2048, 128)
    tn = tile_n or _pick_tile(d_out, 2048, 128)

    grid = (m_pad // tm, d_out // tn, hidden // th)

    # ---- VMEM budget & cost estimate ---------------------------------------
    f32 = jnp.dtype(jnp.float32).itemsize
    tile_bytes = (tm * d_in * itemsize          # x tile
                  + tm * tn * out_dtype.itemsize if hasattr(out_dtype, "itemsize")
                  else tm * tn * jnp.dtype(out_dtype).itemsize)
    tile_bytes = (tm * d_in * itemsize
                  + tm * tn * jnp.dtype(out_dtype).itemsize
                  + d_in * th * itemsize        # W1 tile
                  + th * tn * itemsize          # W2 tile
                  + th * f32 + tn * f32)        # biases
    vmem_bytes = 2 * tile_bytes + tm * tn * f32 + (2 << 20)   # dbl-buffered + acc
    vmem_limit = int(min(max(vmem_bytes, 32 << 20), 100 << 20))

    cost = pl.CostEstimate(
        flops=2 * m * (d_in * hidden + hidden * d_out),
        transcendentals=0,
        bytes_accessed=(m * d_in + d_in * hidden + hidden * d_out
                        + hidden + d_out + m * d_out) * itemsize,
    )

    out = pl.pallas_call(
        _mlp_kernel,
        out_shape=jax.ShapeDtypeStruct((m_pad, d_out), out_dtype),
        grid_spec=pltpu.PrefetchScalarGridSpec(
            num_scalar_prefetch=0,
            grid=grid,
            in_specs=[
                pl.BlockSpec((tm, d_in), lambda i, j, k: (i, 0)),
                pl.BlockSpec((d_in, th), lambda i, j, k: (0, k)),
                pl.BlockSpec((1, th), lambda i, j, k: (0, k)),
                pl.BlockSpec((th, tn), lambda i, j, k: (k, j)),
                pl.BlockSpec((1, tn), lambda i, j, k: (0, j)),
            ],
            out_specs=pl.BlockSpec((tm, tn), lambda i, j, k: (i, j)),
            scratch_shapes=[pltpu.VMEM((tm, tn), jnp.float32)],
        ),
        compiler_params=pltpu.CompilerParams(
            dimension_semantics=("parallel", "parallel", "arbitrary"),
            vmem_limit_bytes=vmem_limit,
        ),
        cost_estimate=cost,
    )(x2, w1c, b1_2d, w2c, b2_2d)

    return out[:m].reshape(*lead_shape, d_out)


def init_mlp_params(key, in_features, hidden_features, out_features,
                    dtype=jnp.float32):
    """Deterministic init mimicking nn.Linear's U(-1/sqrt(fan_in), 1/sqrt(fan_in))."""
    k1, k2, k3, k4 = jax.random.split(key, 4)
    lim1 = 1.0 / jnp.sqrt(in_features)
    lim2 = 1.0 / jnp.sqrt(hidden_features)
    # Stored already transposed: [in, hidden] / [hidden, out].
    w1 = jax.random.uniform(k1, (in_features, hidden_features),
                            dtype, -lim1, lim1)
    b1 = jax.random.uniform(k2, (hidden_features,), dtype, -lim1, lim1)
    w2 = jax.random.uniform(k3, (hidden_features, out_features),
                            dtype, -lim2, lim2)
    b2 = jax.random.uniform(k4, (out_features,), dtype, -lim2, lim2)
    return w1, b1, w2, b2


def _ref_mlp(x, w1, b1, w2, b2):
    h = jnp.maximum(x @ w1 + b1, 0.0)
    return h @ w2 + b2


if __name__ == "__main__":
    # Small shapes consistent with the module: batch=2, seq=8, features=32.
    batch, seq = 2, 8
    in_features, hidden_features, out_features = 32, 64, 32

    key = jax.random.PRNGKey(0)
    kx, kp, kx2 = jax.random.split(key, 3)
    x = jax.random.normal(kx, (batch, seq, in_features), jnp.float32)
    w1, b1, w2, b2 = init_mlp_params(kp, in_features, hidden_features,
                                     out_features)

    # --- f32 path ------------------------------------------------------------
    y = mlp_pallas(x, w1, b1, w2, b2)
    jax.block_until_ready(y)
    y_ref = _ref_mlp(x, w1, b1, w2, b2)
    assert y.shape == (batch, seq, out_features)
    assert jnp.allclose(y, y_ref, atol=1e-5, rtol=1e-5)

    # --- ragged token count (exercises M padding path) -----------------------
    x_ragged = jax.random.normal(kx2, (3, 7, in_features), jnp.float32)
    y_r = mlp_pallas(x_ragged, w1, b1, w2, b2)
    jax.block_until_ready(y_r)
    assert y_r.shape == (3, 7, out_features)
    assert jnp.allclose(y_r, _ref_mlp(x_ragged, w1, b1, w2, b2),
                        atol=1e-5, rtol=1e-5)

    # --- bf16 compute path (MXU-native operands, f32 accumulation) -----------
    y_bf16 = mlp_pallas(x, w1, b1, w2, b2, compute_dtype=jnp.bfloat16)
    jax.block_until_ready(y_bf16)
    assert jnp.allclose(y_bf16.astype(jnp.float32), y_ref, atol=1e-1, rtol=1e-1)

    print("KERNEL_OK")
</pallas_src>

<mosaic_0001>
module attributes {stable_mosaic.version = 11 : i64} {
  func.func @_mlp_kernel(%arg0: i32, %arg1: i32, %arg2: i32, %arg3: memref<16x32xf32, #tpu.memory_space<vmem>>, %arg4: memref<32x64xf32, #tpu.memory_space<vmem>>, %arg5: memref<1x64xf32, #tpu.memory_space<vmem>>, %arg6: memref<64x32xf32, #tpu.memory_space<vmem>>, %arg7: memref<1x32xf32, #tpu.memory_space<vmem>>, %arg8: memref<16x32xf32, #tpu.memory_space<vmem>>, %arg9: memref<16x32xf32, #tpu.memory_space<vmem>>) attributes {dimension_semantics = [#tpu.dimension_semantics<parallel>, #tpu.dimension_semantics<parallel>, #tpu.dimension_semantics<arbitrary>], iteration_bounds = array<i64: 1, 1, 1>, scalar_prefetch = 0 : i64, scratch_operands = 1 : i64, tpu.core_type = #tpu.core_type<tc>, window_params = [{transform_indices = @transform_0, window_bounds = array<i64: 16, 32>}, {transform_indices = @transform_1, window_bounds = array<i64: 32, 64>}, {transform_indices = @transform_2, window_bounds = array<i64: 1, 64>}, {transform_indices = @transform_3, window_bounds = array<i64: 64, 32>}, {transform_indices = @transform_4, window_bounds = array<i64: 1, 32>}, {transform_indices = @transform_5, window_bounds = array<i64: 16, 32>}]} {
    %c0_i32 = arith.constant 0 : i32
    %0 = arith.cmpi eq, %arg2, %c0_i32 : i32
    %1 = arith.extui %0 : i1 to i32
    %c0_i32_0 = arith.constant 0 : i32
    %2 = arith.cmpi ne, %1, %c0_i32_0 : i32
    scf.if %2 {
      %c0_16 = arith.constant 0 : index
      %c0_17 = arith.constant 0 : index
      %19 = vector.load %arg7[%c0_16, %c0_17] : memref<1x32xf32, #tpu.memory_space<vmem>>, vector<1x32xf32>
      %20 = vector.shape_cast %19 : vector<1x32xf32> to vector<1x32xf32>
      %21 = vector.broadcast %20 : vector<1x32xf32> to vector<16x32xf32>
      %c0_18 = arith.constant 0 : index
      %c0_19 = arith.constant 0 : index
      %22 = vector.load %arg9[%c0_18, %c0_19] : memref<16x32xf32, #tpu.memory_space<vmem>>, vector<16x32xf32>
      tpu.vector_store %arg9[%c0_18, %c0_19], %21 {strides = array<i32>} : memref<16x32xf32, #tpu.memory_space<vmem>>, vector<16x32xf32>,
    } else {
    }
    %c0 = arith.constant 0 : index
    %c0_1 = arith.constant 0 : index
    %3 = vector.load %arg3[%c0, %c0_1] : memref<16x32xf32, #tpu.memory_space<vmem>>, vector<16x32xf32>
    %c0_2 = arith.constant 0 : index
    %c0_3 = arith.constant 0 : index
    %4 = vector.load %arg4[%c0_2, %c0_3] : memref<32x64xf32, #tpu.memory_space<vmem>>, vector<32x64xf32>
    %cst = arith.constant dense<0.000000e+00> : vector<16x64xf32>
    %5 = tpu.matmul %3, %4, %cst {dimension_numbers = #tpu.dot_dimension_numbers<[1], [0], [0], [1], [0, 0, 1, 1], [], []>} : vector<16x32xf32>, vector<32x64xf32>, vector<16x64xf32> -> vector<16x64xf32>
    %c0_4 = arith.constant 0 : index
    %c0_5 = arith.constant 0 : index
    %6 = vector.load %arg5[%c0_4, %c0_5] : memref<1x64xf32, #tpu.memory_space<vmem>>, vector<1x64xf32>
    %7 = vector.broadcast %6 : vector<1x64xf32> to vector<16x64xf32>
    %8 = arith.addf %5, %7 : vector<16x64xf32>
    %cst_6 = arith.constant 0.000000e+00 : f32
    %9 = vector.broadcast %cst_6 : f32 to vector<16x64xf32>
    %10 = arith.maximumf %8, %9 : vector<16x64xf32>
    %c0_7 = arith.constant 0 : index
    %c0_8 = arith.constant 0 : index
    %11 = vector.load %arg9[%c0_7, %c0_8] : memref<16x32xf32, #tpu.memory_space<vmem>>, vector<16x32xf32>
    %c0_9 = arith.constant 0 : index
    %c0_10 = arith.constant 0 : index
    %12 = vector.load %arg6[%c0_9, %c0_10] : memref<64x32xf32, #tpu.memory_space<vmem>>, vector<64x32xf32>
    %cst_11 = arith.constant dense<0.000000e+00> : vector<16x32xf32>
    %13 = tpu.matmul %10, %12, %cst_11 {dimension_numbers = #tpu.dot_dimension_numbers<[1], [0], [0], [1], [0, 0, 1, 1], [], []>} : vector<16x64xf32>, vector<64x32xf32>, vector<16x32xf32> -> vector<16x32xf32>
    %14 = arith.addf %11, %13 : vector<16x32xf32>
    %c0_12 = arith.constant 0 : index
    %c0_13 = arith.constant 0 : index
    %15 = vector.load %arg9[%c0_12, %c0_13] : memref<16x32xf32, #tpu.memory_space<vmem>>, vector<16x32xf32>
    tpu.vector_store %arg9[%c0_12, %c0_13], %14 {strides = array<i32>} : memref<16x32xf32, #tpu.memory_space<vmem>>, vector<16x32xf32>,
    %c0_i32_14 = arith.constant 0 : i32
    %16 = arith.cmpi eq, %arg2, %c0_i32_14 : i32
    %17 = arith.extui %16 : i1 to i32
    %c0_i32_15 = arith.constant 0 : i32
    %18 = arith.cmpi ne, %17, %c0_i32_15 : i32
    scf.if %18 {
      %c0_16 = arith.constant 0 : index
      %c0_17 = arith.constant 0 : index
      %19 = vector.load %arg9[%c0_16, %c0_17] : memref<16x32xf32, #tpu.memory_space<vmem>>, vector<16x32xf32>
      %c0_18 = arith.constant 0 : index
      %c0_19 = arith.constant 0 : index
      %20 = vector.load %arg8[%c0_18, %c0_19] : memref<16x32xf32, #tpu.memory_space<vmem>>, vector<16x32xf32>
      tpu.vector_store %arg8[%c0_18, %c0_19], %19 {strides = array<i32>} : memref<16x32xf32, #tpu.memory_space<vmem>>, vector<16x32xf32>,
    } else {
    }
    return
  }
  func.func @transform_0(%arg0: i32, %arg1: i32, %arg2: i32) -> (i32, i32) {
    %c0_i32 = arith.constant 0 : i32
    %c0_i32_0 = arith.constant 0 : i32
    return %arg0, %c0_i32 : i32, i32
  }
  func.func @transform_1(%arg0: i32, %arg1: i32, %arg2: i32) -> (i32, i32) {
    %c0_i32 = arith.constant 0 : i32
    %c0_i32_0 = arith.constant 0 : i32
    return %c0_i32, %arg2 : i32, i32
  }
  func.func @transform_2(%arg0: i32, %arg1: i32, %arg2: i32) -> (i32, i32) {
    %c0_i32 = arith.constant 0 : i32
    %c0_i32_0 = arith.constant 0 : i32
    return %c0_i32, %arg2 : i32, i32
  }
  func.func @transform_3(%arg0: i32, %arg1: i32, %arg2: i32) -> (i32, i32) {
    %c0_i32 = arith.constant 0 : i32
    return %arg2, %arg1 : i32, i32
  }
  func.func @transform_4(%arg0: i32, %arg1: i32, %arg2: i32) -> (i32, i32) {
    %c0_i32 = arith.constant 0 : i32
    %c0_i32_0 = arith.constant 0 : i32
    return %c0_i32, %arg1 : i32, i32
  }
  func.func @transform_5(%arg0: i32, %arg1: i32, %arg2: i32) -> (i32, i32) {
    %c0_i32 = arith.constant 0 : i32
    return %arg0, %arg1 : i32, i32
  }
}

</mosaic_0001>

<llo_original>
// kernel: tpu_custom_call.1
$region0: #{tpu_custom_call.1}
  #allocation0 [shape = 'u32[]', space=smem, size = 0x4, offset = 0x4, fixed_abs, tag = 'smem constant byte address 0x4 - core index']
  #allocation1 [shape = 'u32[144,128]{1,0:T(1,128)}', space=vmem, size = 0x12000, scoped, tag = 'internal scratch']
  #allocation2 [shape = 'f32[16,32]{1,0:T(8,128)}', space=vmem, size = 0x2000, scoped, tag = 'scratch operand']
  %s0 = inlined_call_operand.vmem [shape: f32[16,32], index: 0, kind: input, shape index: {}]
  %s1 = inlined_call_operand.vmem [shape: f32[32,64], index: 1, kind: input, shape index: {}]
  %s2 = inlined_call_operand.vmem [shape: f32[1,64], index: 2, kind: input, shape index: {}]
  %s3 = inlined_call_operand.vmem [shape: f32[64,32], index: 3, kind: input, shape index: {}]
  %s4 = inlined_call_operand.vmem [shape: f32[1,32], index: 4, kind: input, shape index: {}]
  %s5 = inlined_call_operand.hbm [shape: f32[16,32], index: 5, kind: output, shape index: {}]
  %s6 = sld [smem:[#allocation0]]
  $region38: #{tpu_custom_call.1} parent=0
    _
  %s8 = ssub.s32 1, %s6
  %s9 = scalar_select 0, %s8, %s6
  $region1: #{tpu_custom_call.1} parent=0
    #allocation3 [shape = 'u8[8192]{0}', space=vmem, size = 0x2000, scoped, tag = 'output window, operand 0, single buffered']
    #allocation4 [shape = 's32[1]{0}', space=sflag, size = 0x4, scoped, tag = 'scoped memory for tpu_custom_call.1']
    %10 = vsyncpa [#allocation4], 0
    // Predicated region
    $region2: #{tpu_custom_call.1} parent=1 // pred_check
      _
    $region3: #{tpu_custom_call.1} parent=1 // pred_check_branch
      %12 = sbr.rel (0) target = $region5
    $region4: #{tpu_custom_call.1} parent=1 // pred_region
      _
    $region5: #{tpu_custom_call.1} parent=1 // pred_fallthru
      _
    // Predicated region
    $region6: #{tpu_custom_call.1} parent=1 // pred_check
      _
    $region7: #{tpu_custom_call.1} parent=1 // pred_check_branch
      %14 = sbr.rel (0) target = $region9
    $region8: #{tpu_custom_call.1} parent=1 // pred_region
      _
    $region9: #{tpu_custom_call.1} parent=1 // pred_fallthru
      _
    // Predicated region
    $region10: #{tpu_custom_call.1} parent=1 // pred_check
      _
    $region11: #{tpu_custom_call.1} parent=1 // pred_check_branch
      %16 = sbr.rel (0) target = $region13
    $region12: #{tpu_custom_call.1} parent=1 // pred_region
      _
    $region13: #{tpu_custom_call.1} parent=1 // pred_fallthru
      _
    // Predicated region
    $region14: #{tpu_custom_call.1} parent=1 // pred_check
      _
    $region15: #{tpu_custom_call.1} parent=1 // pred_check_branch
      %18 = sbr.rel (0) target = $region17
    $region16: #{tpu_custom_call.1} parent=1 // pred_region
      _
    $region17: #{tpu_custom_call.1} parent=1 // pred_fallthru
      _
    // Predicated region
    $region18: #{tpu_custom_call.1} parent=1 // pred_check
      _
    $region19: #{tpu_custom_call.1} parent=1 // pred_check_branch
      %20 = sbr.rel (0) target = $region21
    $region20: #{tpu_custom_call.1} parent=1 // pred_region
      _
    $region21: #{tpu_custom_call.1} parent=1 // pred_fallthru
      _
    %p21 = scmp.eq.s32.totalorder 0, 0
    // Predicated region
    $region22: #{tpu_custom_call.1} parent=1 // pred_check
      %p22 = pneg %p21
    $region23: #{tpu_custom_call.1} parent=1 // pred_check_branch
      %24 = sbr.rel (%p22) target = $region25
    $region24: #{tpu_custom_call.1} parent=1 // pred_region
      %v25 = vld [vmem:[%s4] sm:$0x1]
      %v27 = vlaneseq
      %v28 = vshrl.u32 %v27, 7
      %v29 = vsub.s32 0, %v28
      %v30 = vrot.slane %v25, %v29
      %vm32 = vcmask 261120
      %33 = vst.msk [vmem:[#allocation2] sm:$0xff] %vm32, %v30
      %34 = vst.msk [vmem:[#allocation2 + $0x8] sm:$0xff] %vm32, %v30
    $region25: #{tpu_custom_call.1} parent=1 // pred_fallthru
      _
    %v35 = vld [vmem:[%s0] sm:$0xff]
    %v36 = vld [vmem:[%s0 + $0x8] sm:$0xff]
    %v37 = vld [vmem:[%s1] sm:$0xff]
    %v38 = vld [vmem:[%s1 + $0x8] sm:$0xff]
    %v39 = vld [vmem:[%s1 + $0x10] sm:$0xff]
    %v40 = vld [vmem:[%s1 + $0x18] sm:$0xff]
    %v41 = vld [vmem:[%s2] sm:$0x1]
    %v43 = vlaneseq
    %v44 = vshrl.u32 %v43, 7
    %v45 = vsub.s32 0, %v44
    %v46 = vrot.slane %v41, %v45
    %vm48 = vcmask 261120
    %v50 = vsel %vm48, %v35, 0
    %v53 = vsel %vm48, %v36, 0
    %55 = vmatprep.subr.mxu0 0.0
    %56 = vmatpush1.msra.mxu0 %v37
    %57 = vmatprep.subr.mxu0 0.0
    %58 = vmatpush1.msra.mxu0 %v38
    %59 = vmatprep.subr.mxu0 0.0
    %60 = vmatpush1.msra.mxu0 %v39
    %61 = vmatprep.subr.mxu0 0.0
    %62 = vmatpush1.msra.mxu0 %v40
    %63 = vmatprep.subr.mxu0 0.0
    %64 = vmatpush1.msra.mxu0 0.0
    %65 = vmatprep.subr.mxu0 0.0
    %66 = vmatpush1.msra.mxu0 0.0
    %67 = vmatprep.subr.mxu0 0.0
    %68 = vmatpush1.msra.mxu0 0.0
    %69 = vmatprep.subr.mxu0 0.0
    %70 = vmatpush1.msra.mxu0 0.0
    %71 = vmatprep.subr.mxu0 0.0
    %72 = vmatpush1.msra.mxu0 0.0
    %73 = vmatprep.subr.mxu0 0.0
    %74 = vmatpush1.msra.mxu0 0.0
    %75 = vmatprep.subr.mxu0 0.0
    %76 = vmatpush1.msra.mxu0 0.0
    %77 = vmatprep.subr.mxu0 0.0
    %78 = vmatpush1.msra.mxu0 0.0
    %79 = vmatprep.subr.mxu0 0.0
    %80 = vmatpush1.msra.mxu0 0.0
    %81 = vmatprep.subr.mxu0 0.0
    %82 = vmatpush1.msra.mxu0 0.0
    %83 = vmatprep.subr.mxu0 0.0
    %84 = vmatpush1.msra.mxu0 0.0
    %85 = vmatprep.subr.mxu0 0.0
    %86 = vmatpush1.msra.mxu0 0.0
    %87 = vmatprep.subr.mxu0 0.0
    %88 = vmatpush1.msra.mxu0 0.0
    %89 = vmatprep.subr.mxu0 0.0
    %90 = vmatpush1.msra.mxu0 0.0
    %91 = vmatprep.subr.mxu0 0.0
    %92 = vmatpush1.msra.mxu0 0.0
    %93 = vmatprep.subr.mxu0 0.0
    %94 = vmatpush1.msra.mxu0 0.0
    %95 = vmatprep.subr.mxu0 0.0
    %96 = vmatpush1.msra.mxu0 0.0
    %97 = vmatprep.subr.mxu0 0.0
    %98 = vmatpush1.msra.mxu0 0.0
    %99 = vmatprep.subr.mxu0 0.0
    %100 = vmatpush1.msra.mxu0 0.0
    %101 = vmatprep.subr.mxu0 0.0
    %102 = vmatpush1.msra.mxu0 0.0
    %103 = vmatprep.subr.mxu0 0.0
    %104 = vmatpush1.msra.mxu0 0.0
    %105 = vmatprep.subr.mxu0 0.0
    %106 = vmatpush1.msra.mxu0 0.0
    %107 = vmatprep.subr.mxu0 0.0
    %108 = vmatpush1.msra.mxu0 0.0
    %109 = vmatprep.subr.mxu0 0.0
    %110 = vmatpush1.msra.mxu0 0.0
    %111 = vmatprep.subr.mxu0 0.0
    %112 = vmatpush1.msra.mxu0 0.0
    %113 = vmatprep.subr.mxu0 0.0
    %114 = vmatpush1.msra.mxu0 0.0
    %115 = vmatprep.subr.mxu0 0.0
    %116 = vmatpush1.msra.mxu0 0.0
    %117 = vmatprep.subr.mxu0 0.0
    %118 = vmatpush1.msra.mxu0 0.0
    %119 = vmatprep.mubr.f32.mxu0 0.0
    %120 = vmatmul.mubr.f32.gmra.mrb[0].mxu0 %v50
    %v121 = vpop.f32.mrb[0].mxu0
    %v122 = vadd.f32 %v46, %v121
    %v123 = vpop.f32.mrb[0].mxu0
    %124 = vmatprep.mubr.f32.mxu0 0.0
    %125 = vmatmul.mubr.f32.gmra.mrb[0].mxu0 %v53
    %v126 = vpop.f32.mrb[0].mxu0
    %v127 = vadd.f32 %v46, %v126
    %v128 = vpop.f32.mrb[0].mxu0
    %129 = vdwg.mxu0
    %v130 = vmax.f32 %v122, 0.0
    %v131 = vmax.f32 %v127, 0.0
    %v132 = vld [vmem:[#allocation2] sm:$0xff]
    %v133 = vld [vmem:[#allocation2 + $0x8] sm:$0xff]
    %v134 = vld [vmem:[%s3] sm:$0xff]
    %v135 = vld [vmem:[%s3 + $0x8] sm:$0xff]
    %v136 = vld [vmem:[%s3 + $0x10] sm:$0xff]
    %v137 = vld [vmem:[%s3 + $0x18] sm:$0xff]
    %v138 = vld [vmem:[%s3 + $0x20] sm:$0xff]
    %v139 = vld [vmem:[%s3 + $0x28] sm:$0xff]
    %v140 = vld [vmem:[%s3 + $0x30] sm:$0xff]
    %v141 = vld [vmem:[%s3 + $0x38] sm:$0xff]
    %vm142 = vcmask 523264
    %v144 = vsel %vm142, %v130, 0
    %v147 = vsel %vm142, %v131, 0
    %149 = vmatprep.subr.mxu0 0.0
    %150 = vmatpush1.msra.mxu0 %v134
    %151 = vmatprep.subr.mxu0 0.0
    %152 = vmatpush1.msra.mxu0 %v135
    %153 = vmatprep.subr.mxu0 0.0
    %154 = vmatpush1.msra.mxu0 %v136
    %155 = vmatprep.subr.mxu0 0.0
    %156 = vmatpush1.msra.mxu0 %v137
    %157 = vmatprep.subr.mxu0 0.0
    %158 = vmatpush1.msra.mxu0 %v138
    %159 = vmatprep.subr.mxu0 0.0
    %160 = vmatpush1.msra.mxu0 %v139
    %161 = vmatprep.subr.mxu0 0.0
    %162 = vmatpush1.msra.mxu0 %v140
    %163 = vmatprep.subr.mxu0 0.0
    %164 = vmatpush1.msra.mxu0 %v141
    %165 = vmatprep.subr.mxu0 0.0
    %166 = vmatpush1.msra.mxu0 0.0
    %167 = vmatprep.subr.mxu0 0.0
    %168 = vmatpush1.msra.mxu0 0.0
    %169 = vmatprep.subr.mxu0 0.0
    %170 = vmatpush1.msra.mxu0 0.0
    %171 = vmatprep.subr.mxu0 0.0
    %172 = vmatpush1.msra.mxu0 0.0
    %173 = vmatprep.subr.mxu0 0.0
    %174 = vmatpush1.msra.mxu0 0.0
    %175 = vmatprep.subr.mxu0 0.0
    %176 = vmatpush1.msra.mxu0 0.0
    %177 = vmatprep.subr.mxu0 0.0
    %178 = vmatpush1.msra.mxu0 0.0
    %179 = vmatprep.subr.mxu0 0.0
    %180 = vmatpush1.msra.mxu0 0.0
    %181 = vmatprep.subr.mxu0 0.0
    %182 = vmatpush1.msra.mxu0 0.0
    %183 = vmatprep.subr.mxu0 0.0
    %184 = vmatpush1.msra.mxu0 0.0
    %185 = vmatprep.subr.mxu0 0.0
    %186 = vmatpush1.msra.mxu0 0.0
    %187 = vmatprep.subr.mxu0 0.0
    %188 = vmatpush1.msra.mxu0 0.0
    %189 = vmatprep.subr.mxu0 0.0
    %190 = vmatpush1.msra.mxu0 0.0
    %191 = vmatprep.subr.mxu0 0.0
    %192 = vmatpush1.msra.mxu0 0.0
    %193 = vmatprep.subr.mxu0 0.0
    %194 = vmatpush1.msra.mxu0 0.0
    %195 = vmatprep.subr.mxu0 0.0
    %196 = vmatpush1.msra.mxu0 0.0
    %197 = vmatprep.subr.mxu0 0.0
    %198 = vmatpush1.msra.mxu0 0.0
    %199 = vmatprep.subr.mxu0 0.0
    %200 = vmatpush1.msra.mxu0 0.0
    %201 = vmatprep.subr.mxu0 0.0
    %202 = vmatpush1.msra.mxu0 0.0
    %203 = vmatprep.subr.mxu0 0.0
    %204 = vmatpush1.msra.mxu0 0.0
    %205 = vmatprep.subr.mxu0 0.0
    %206 = vmatpush1.msra.mxu0 0.0
    %207 = vmatprep.subr.mxu0 0.0
    %208 = vmatpush1.msra.mxu0 0.0
    %209 = vmatprep.subr.mxu0 0.0
    %210 = vmatpush1.msra.mxu0 0.0
    %211 = vmatprep.subr.mxu0 0.0
    %212 = vmatpush1.msra.mxu0 0.0
    %213 = vmatprep.mubr.f32.mxu0 0.0
    %214 = vmatmul.mubr.f32.gmra.mrb[0].mxu0 %v144
    %v215 = vpop.f32.mrb[0].mxu0
    %v216 = vadd.f32 0.0, %v215
    %v217 = vpop.f32.mrb[0].mxu0
    %218 = vmatprep.mubr.f32.mxu0 0.0
    %219 = vmatmul.mubr.f32.gmra.mrb[0].mxu0 %v147
    %v220 = vpop.f32.mrb[0].mxu0
    %v221 = vadd.f32 0.0, %v220
    %v222 = vpop.f32.mrb[0].mxu0
    %223 = vdwg.mxu0
    %v224 = vadd.f32 %v132, %v216
    %v225 = vadd.f32 %v133, %v221
    %226 = vst.msk [vmem:[#allocation2] sm:$0xff] %vm48, %v224
    %227 = vst.msk [vmem:[#allocation2 + $0x8] sm:$0xff] %vm48, %v225
    // Predicated region
    $region26: #{tpu_custom_call.1} parent=1 // pred_check
      %p228 = pneg %p21
    $region27: #{tpu_custom_call.1} parent=1 // pred_check_branch
      %230 = sbr.rel (%p228) target = $region29
    $region28: #{tpu_custom_call.1} parent=1 // pred_region
      %v231 = vld [vmem:[#allocation2] sm:$0xff]
      %v232 = vld [vmem:[#allocation2 + $0x8] sm:$0xff]
      %233 = vst.msk [vmem:[#allocation3] sm:$0xff] %vm48, %v231
      %234 = vst.msk [vmem:[#allocation3 + $0x8] sm:$0xff] %vm48, %v232
    $region29: #{tpu_custom_call.1} parent=1 // pred_fallthru
      _
    // Predicated region
    $region30: #{tpu_custom_call.1} parent=1 // pred_check
      _
    $region31: #{tpu_custom_call.1} parent=1 // pred_check_branch
      %236 = sbr.rel (0) target = $region33
    $region32: #{tpu_custom_call.1} parent=1 // pred_region
      %s238 = ssub.s32 256, 256
      %239 = vsyncadd [#allocation4], %s238
      %s240 = sshll.u32 [#allocation3], 4
      %s241 = int_to_ptr.vmem [resolvable:$true] %s240
      %246 = dma.vmem_to_hbm [thread:$0]  %s241, 256, %s5, [#allocation4], 128, 128, 8
    $region33: #{tpu_custom_call.1} parent=1 // pred_fallthru
      _
    // Predicated region
    $region34: #{tpu_custom_call.1} parent=1 // pred_check
      _
    $region35: #{tpu_custom_call.1} parent=1 // pred_check_branch
      %248 = sbr.rel (0) target = $region37
    $region36: #{tpu_custom_call.1} parent=1 // pred_region
      %249 = dma.done [#allocation4], 256
    $region37: #{tpu_custom_call.1} parent=1 // pred_fallthru
      _
    %250 = vsyncpa [#allocation4], 1

</llo_original>
